<compile_context>
chip_gen: v5e
topology: v5e:2x2
jax: 0.10.0
libtpu: 0.0.40
codegen_flags: <defaults>
</compile_context>

<pallas_src>
import jax
import jax.numpy as jnp
from jax.experimental import pallas as pl
from jax.experimental.pallas import tpu as pltpu


# ---------------------------------------------------------------------------
# Kernels
# ---------------------------------------------------------------------------
def _add_kernel(x_ref, vec_ref, o_ref):
    # x_ref: (TR, C); vec_ref: (1, C) broadcasts over the sublane (row) axis.
    o_ref[...] = x_ref[...] + vec_ref[...]


def _masked_add_kernel(x_ref, vec_ref, mask_ref, o_ref):
    # mask_ref: (TR, 1) or (TR, C) int8; nonzero = apply attack on that element/row.
    x = x_ref[...]
    o_ref[...] = jnp.where(mask_ref[...] != 0, x + vec_ref[...], x)


# ---------------------------------------------------------------------------
# Tiling helpers
# ---------------------------------------------------------------------------
def _round_up(n, m):
    return -(-n // m) * m


def _vmem_budget():
    """Generation-aware (tile_target_bytes, vmem_limit_bytes)."""
    try:
        cap = pltpu.get_tpu_info().vmem_capacity_bytes
    except Exception:
        cap = 64 * 1024 * 1024  # conservative (v7x-sized) fallback
    if cap >= 128 * 1024 * 1024:      # v5e / v6e: 128 MiB physical VMEM
        return 8 << 20, 64 * 1024 * 1024
    return 4 << 20, 32 * 1024 * 1024  # v7x: 64 MiB physical VMEM


def _pick_row_tile(total_rows, row_bytes, target_bytes, min_steps=4):
    """Row-tile ~target_bytes, sublane-aligned, with >= min_steps grid steps if possible."""
    sub = 32  # safe sublane multiple for fp32(8) / bf16(16) / int8(32) packing
    tr = max(sub, (target_bytes // max(row_bytes, 1)) // sub * sub)
    # Cap so the grid has at least `min_steps` steps (pipeline overlap + v7x megacore).
    cap = max(sub, _round_up(pl.cdiv(total_rows, min_steps), sub))
    tr = min(tr, cap)
    if tr >= total_rows:
        return total_rows  # full-extent block is always a legal block shape
    return tr


# ---------------------------------------------------------------------------
# Wrapper
# ---------------------------------------------------------------------------
def universal_vector_adversary(x, vector, attack_mask=None, donate_x=False):
    """x: (B, S, D); vector: (1, D); attack_mask: (B, S) bool or None."""
    B, S, D = x.shape
    R = B * S

    # Match PyTorch only when the parameter is kept in x.dtype; we cast explicitly here.
    vector = vector.astype(x.dtype)

    # Lane folding: fold g rows per slab row so the last dim is a multiple of 128.
    g = 1
    if D < 128 and (128 % D == 0) and (R % (128 // D) == 0):
        g = 128 // D
    rows, cols = R // g, g * D

    x2 = x.reshape(rows, cols)                             # free reshape (contiguous)
    vec2 = jnp.tile(vector, (1, g)) if g > 1 else vector   # (1, cols), built once

    itemsize = jnp.dtype(x.dtype).itemsize
    target_bytes, vmem_limit = _vmem_budget()
    TR = _pick_row_tile(rows, cols * itemsize, target_bytes)
    grid = (pl.cdiv(rows, TR),)

    x_spec = pl.BlockSpec((TR, cols), lambda i: (i, 0))
    vec_spec = pl.BlockSpec((1, cols), lambda i: (0, 0))
    out_spec = pl.BlockSpec((TR, cols), lambda i: (i, 0))

    compiler_params = pltpu.CompilerParams(
        dimension_semantics=("parallel",),
        vmem_limit_bytes=vmem_limit,
    )
    out_shape = jax.ShapeDtypeStruct((rows, cols), x.dtype)
    aliases = {0: 0} if donate_x else {}

    if attack_mask is None:
        cost = pl.CostEstimate(
            flops=R * D,
            transcendentals=0,
            bytes_accessed=2 * R * D * itemsize + D * itemsize,
        )
        out2 = pl.pallas_call(
            _add_kernel,
            out_shape=out_shape,
            grid_spec=pltpu.PrefetchScalarGridSpec(
                num_scalar_prefetch=0,
                grid=grid,
                in_specs=[x_spec, vec_spec],
                out_specs=out_spec,
            ),
            compiler_params=compiler_params,
            cost_estimate=cost,
            input_output_aliases=aliases,
        )(x2, vec2)
    else:
        if g > 1:
            # Lane-dense mask: replicate each row-mask over its D lanes (wrapper-side).
            mask2 = (
                jnp.broadcast_to(attack_mask.reshape(rows, g, 1), (rows, g, D))
                .reshape(rows, cols)
                .astype(jnp.int8)
            )
            mask_spec = pl.BlockSpec((TR, cols), lambda i: (i, 0))
            mask_bytes = rows * cols
        else:
            # Tiny (R, 1) int8 column mask; lane-broadcast happens in-register.
            mask2 = attack_mask.reshape(rows, 1).astype(jnp.int8)
            mask_spec = pl.BlockSpec((TR, 1), lambda i: (i, 0))
            mask_bytes = rows
        cost = pl.CostEstimate(
            flops=2 * R * D,
            transcendentals=0,
            bytes_accessed=2 * R * D * itemsize + D * itemsize + mask_bytes,
        )
        out2 = pl.pallas_call(
            _masked_add_kernel,
            out_shape=out_shape,
            grid_spec=pltpu.PrefetchScalarGridSpec(
                num_scalar_prefetch=0,
                grid=grid,
                in_specs=[x_spec, vec_spec, mask_spec],
                out_specs=out_spec,
            ),
            compiler_params=compiler_params,
            cost_estimate=cost,
            input_output_aliases=aliases,
        )(x2, vec2, mask2)

    return out2.reshape(B, S, D)


def init_vector(key, dim, dtype=jnp.float32):
    # torch.nn.init.kaiming_uniform_ on a (1, dim) tensor (default a=0):
    # fan_in = dim, gain = sqrt(2), bound = gain * sqrt(3 / fan_in) = sqrt(6 / dim)
    bound = jnp.sqrt(6.0 / dim)
    return jax.random.uniform(key, (1, dim), dtype=dtype, minval=-bound, maxval=bound)


# TODO(synk): clip_attack (epsilon-ball projection of the parameter) is a training-time
# utility, not part of forward; implement with plain jnp on the (1, dim) parameter.

if __name__ == "__main__":
    key = jax.random.PRNGKey(0)
    kx, kv, km, kx2, kv2, km2 = jax.random.split(key, 6)

    # --- small-D case (exercises lane folding: D=32 -> g=4, cols=128) ---
    B, S, D = 2, 8, 32
    x = jax.random.normal(kx, (B, S, D), dtype=jnp.float32)
    vector = init_vector(kv, D)
    attack_mask = jax.random.bernoulli(km, 0.5, (B, S))

    out_none = jax.block_until_ready(universal_vector_adversary(x, vector, None))
    ref_none = x + vector[None, :, :]
    assert jnp.allclose(out_none, ref_none, atol=1e-6), "no-mask path mismatch (D=32)"

    out_mask = jax.block_until_ready(universal_vector_adversary(x, vector, attack_mask))
    ref_mask = jnp.where(attack_mask[:, :, None], x + vector[None, :, :], x)
    assert jnp.allclose(out_mask, ref_mask, atol=1e-6), "masked path mismatch (D=32)"

    # --- lane-aligned case (D=128 -> no folding, (R,1) column mask path) ---
    B2, S2, D2 = 2, 8, 128
    x2 = jax.random.normal(kx2, (B2, S2, D2), dtype=jnp.float32)
    vector2 = init_vector(kv2, D2)
    attack_mask2 = jax.random.bernoulli(km2, 0.5, (B2, S2))

    out_none2 = jax.block_until_ready(universal_vector_adversary(x2, vector2, None))
    ref_none2 = x2 + vector2[None, :, :]
    assert jnp.allclose(out_none2, ref_none2, atol=1e-6), "no-mask path mismatch (D=128)"

    out_mask2 = jax.block_until_ready(universal_vector_adversary(x2, vector2, attack_mask2))
    ref_mask2 = jnp.where(attack_mask2[:, :, None], x2 + vector2[None, :, :], x2)
    assert jnp.allclose(out_mask2, ref_mask2, atol=1e-6), "masked path mismatch (D=128)"

    print("KERNEL_OK")
</pallas_src>

<mosaic_0001>
module attributes {stable_mosaic.version = 11 : i64} {
  func.func @_add_kernel(%arg0: i32, %arg1: memref<4x128xf32, #tpu.memory_space<vmem>>, %arg2: memref<1x128xf32, #tpu.memory_space<vmem>>, %arg3: memref<4x128xf32, #tpu.memory_space<vmem>>) attributes {dimension_semantics = [#tpu.dimension_semantics<parallel>], iteration_bounds = array<i64: 1>, scalar_prefetch = 0 : i64, scratch_operands = 0 : i64, tpu.core_type = #tpu.core_type<tc>, window_params = [{transform_indices = @transform_0, window_bounds = array<i64: 4, 128>}, {pipeline_mode = #tpu.pipeline_mode<synchronous>, transform_indices = @transform_1, window_bounds = array<i64: 1, 128>}, {transform_indices = @transform_2, window_bounds = array<i64: 4, 128>}]} {
    %c0 = arith.constant 0 : index
    %c0_0 = arith.constant 0 : index
    %0 = vector.load %arg1[%c0, %c0_0] : memref<4x128xf32, #tpu.memory_space<vmem>>, vector<4x128xf32>
    %c0_1 = arith.constant 0 : index
    %c0_2 = arith.constant 0 : index
    %1 = vector.load %arg2[%c0_1, %c0_2] : memref<1x128xf32, #tpu.memory_space<vmem>>, vector<1x128xf32>
    %2 = vector.broadcast %1 : vector<1x128xf32> to vector<4x128xf32>
    %3 = arith.addf %0, %2 : vector<4x128xf32>
    %c0_3 = arith.constant 0 : index
    %c0_4 = arith.constant 0 : index
    %4 = vector.load %arg3[%c0_3, %c0_4] : memref<4x128xf32, #tpu.memory_space<vmem>>, vector<4x128xf32>
    tpu.vector_store %arg3[%c0_3, %c0_4], %3 {strides = array<i32>} : memref<4x128xf32, #tpu.memory_space<vmem>>, vector<4x128xf32>,
    return
  }
  func.func @transform_0(%arg0: i32) -> (i32, i32) {
    %c0_i32 = arith.constant 0 : i32
    %c0_i32_0 = arith.constant 0 : i32
    return %arg0, %c0_i32 : i32, i32
  }
  func.func @transform_1(%arg0: i32) -> (i32, i32) {
    %c0_i32 = arith.constant 0 : i32
    %c0_i32_0 = arith.constant 0 : i32
    %c0_i32_1 = arith.constant 0 : i32
    return %c0_i32, %c0_i32_0 : i32, i32
  }
  func.func @transform_2(%arg0: i32) -> (i32, i32) {
    %c0_i32 = arith.constant 0 : i32
    %c0_i32_0 = arith.constant 0 : i32
    return %arg0, %c0_i32 : i32, i32
  }
}

</mosaic_0001>

<llo_original>
// kernel: tpu_custom_call.1
$region0: #{tpu_custom_call.1}
  #allocation0 [shape = 'u32[]', space=smem, size = 0x4, offset = 0x4, fixed_abs, tag = 'smem constant byte address 0x4 - core index']
  #allocation1 [shape = 'u32[72,128]{1,0:T(1,128)}', space=vmem, size = 0x9000, scoped, tag = 'internal scratch']
  %s0 = inlined_call_operand.hbm [shape: f32[4,128], index: 0, kind: input, shape index: {}]
  %s1 = inlined_call_operand.hbm [shape: f32[1,128], index: 1, kind: input, shape index: {}]
  %s2 = inlined_call_operand.hbm [shape: f32[4,128], index: 2, kind: output, shape index: {}]
  %s3 = sld [smem:[#allocation0]]
  $region26: #{tpu_custom_call.1} parent=0
    _
  %s5 = ssub.s32 1, %s3
  %s6 = scalar_select 0, %s5, %s3
  $region1: #{tpu_custom_call.1} parent=0
    #allocation2 [shape = 'u8[2048]{0}', space=vmem, size = 0x800, scoped, tag = 'input window, operand 0, single buffered']
    #allocation3 [shape = 's32[1]{0}', space=sflag, size = 0x4, scoped, tag = 'scoped memory for tpu_custom_call.1']
    #allocation4 [shape = 's32[1]{0}', space=sflag, size = 0x4, scoped, tag = 'scoped memory for tpu_custom_call.1']
    #allocation5 [shape = 'u8[512]{0}', space=vmem, size = 0x400, scoped, tag = 'input window, operand 1, single buffered']
    #allocation6 [shape = 's32[1]{0}', space=sflag, size = 0x4, scoped, tag = 'scoped memory for tpu_custom_call.1']
    #allocation7 [shape = 'u8[2048]{0}', space=vmem, size = 0x800, scoped, tag = 'output window, operand 0, single buffered']
    %7 = vsyncpa [#allocation3], 0
    %8 = vsyncpa [#allocation6], 0
    %9 = vsyncpa [#allocation4], 0
    // Predicated region
    $region2: #{tpu_custom_call.1} parent=1 // pred_check
      _
    $region3: #{tpu_custom_call.1} parent=1 // pred_check_branch
      %11 = sbr.rel (0) target = $region5
    $region4: #{tpu_custom_call.1} parent=1 // pred_region
      %13 = vsyncadd [#allocation3], 0
      %s15 = sshll.u32 %s0, 4
      %s16 = int_to_ptr.hbm [resolvable:$true] %s15
      %s17 = sshll.u32 [#allocation2], 4
      %s18 = int_to_ptr.vmem [resolvable:$true] %s17
      %20 = dma.hbm_to_vmem [thread:$0]  %s16, 64, %s18, [#allocation3]
    $region5: #{tpu_custom_call.1} parent=1 // pred_fallthru
      _
    // Predicated region
    $region6: #{tpu_custom_call.1} parent=1 // pred_check
      _
    $region7: #{tpu_custom_call.1} parent=1 // pred_check_branch
      %22 = sbr.rel (0) target = $region9
    $region8: #{tpu_custom_call.1} parent=1 // pred_region
      %24 = vsyncadd [#allocation6], 0
      %s26 = sshll.u32 %s1, 4
      %s27 = int_to_ptr.hbm [resolvable:$true] %s26
      %s28 = sshll.u32 [#allocation5], 4
      %s29 = int_to_ptr.vmem [resolvable:$true] %s28
      %31 = dma.hbm_to_vmem [thread:$0]  %s27, 16, %s29, [#allocation6]
    $region9: #{tpu_custom_call.1} parent=1 // pred_fallthru
      _
    // Predicated region
    $region10: #{tpu_custom_call.1} parent=1 // pred_check
      _
    $region11: #{tpu_custom_call.1} parent=1 // pred_check_branch
      %33 = sbr.rel (0) target = $region13
    $region12: #{tpu_custom_call.1} parent=1 // pred_region
      %35 = dma.done [#allocation3], 64
    $region13: #{tpu_custom_call.1} parent=1 // pred_fallthru
      _
    // Predicated region
    $region14: #{tpu_custom_call.1} parent=1 // pred_check
      _
    $region15: #{tpu_custom_call.1} parent=1 // pred_check_branch
      %37 = sbr.rel (0) target = $region17
    $region16: #{tpu_custom_call.1} parent=1 // pred_region
      %39 = dma.done [#allocation6], 16
    $region17: #{tpu_custom_call.1} parent=1 // pred_fallthru
      _
    %v40 = vld [vmem:[#allocation2] sm:$0xf]
    %v41 = vld [vmem:[#allocation5] sm:$0x1]
    %v43 = vperm.slane %v41, 0
    %v45 = vadd.f32 %v40, %v43
    %46 = vst [vmem:[#allocation7] sm:$0xf] %v45
    // Predicated region
    $region18: #{tpu_custom_call.1} parent=1 // pred_check
      _
    $region19: #{tpu_custom_call.1} parent=1 // pred_check_branch
      %48 = sbr.rel (0) target = $region21
    $region20: #{tpu_custom_call.1} parent=1 // pred_region
      %50 = vsyncadd [#allocation4], 0
      %s52 = sshll.u32 [#allocation7], 4
      %s53 = int_to_ptr.vmem [resolvable:$true] %s52
      %s54 = sshll.u32 %s2, 4
      %s55 = int_to_ptr.hbm [resolvable:$true] %s54
      %57 = dma.vmem_to_hbm [thread:$0]  %s53, 64, %s55, [#allocation4]
    $region21: #{tpu_custom_call.1} parent=1 // pred_fallthru
      _
    // Predicated region
    $region22: #{tpu_custom_call.1} parent=1 // pred_check
      _
    $region23: #{tpu_custom_call.1} parent=1 // pred_check_branch
      %59 = sbr.rel (0) target = $region25
    $region24: #{tpu_custom_call.1} parent=1 // pred_region
      %61 = dma.done [#allocation4], 64
    $region25: #{tpu_custom_call.1} parent=1 // pred_fallthru
      _
    %62 = vsyncpa [#allocation3], 1
    %63 = vsyncpa [#allocation6], 1
    %64 = vsyncpa [#allocation4], 1

</llo_original>
